<compile_context>
chip_gen: v7x
topology: tpu7x:2x2x1
jax: 0.10.0
libtpu: 0.0.40
codegen_flags: <defaults>
</compile_context>

<pallas_src>
import jax
import jax.numpy as jnp
from jax.experimental import pallas as pl
from jax.experimental.pallas import tpu as pltpu


# ---------------------------------------------------------------------------
# Primary path: zero data movement (aliased output, no-op body).
# ---------------------------------------------------------------------------
def _noop_alias_kernel(x_ref, o_ref):
    del x_ref  # output is the same HBM buffer; nothing to read or write
    pltpu.touch(o_ref)  # fake read+write dep: mark the aliased output as produced


def _zero_copy_squeeze(x_sq):
    return pl.pallas_call(
        _noop_alias_kernel,
        out_shape=jax.ShapeDtypeStruct(x_sq.shape, x_sq.dtype),
        in_specs=[pl.BlockSpec(memory_space=pl.ANY)],
        out_specs=pl.BlockSpec(memory_space=pl.ANY),
        input_output_aliases={0: 0},
        compiler_params=pltpu.CompilerParams(has_side_effects=True),
    )(x_sq)


# ---------------------------------------------------------------------------
# Fallback path: one HBM->HBM DMA (no VMEM round trip, no grid overhead).
# ---------------------------------------------------------------------------
def _dma_copy_kernel(x_hbm, o_hbm, sem):
    cp = pltpu.make_async_copy(x_hbm, o_hbm, sem)
    cp.start()
    cp.wait()


def _dma_copy_squeeze(x_sq):
    return pl.pallas_call(
        _dma_copy_kernel,
        out_shape=jax.ShapeDtypeStruct(x_sq.shape, x_sq.dtype),
        in_specs=[pl.BlockSpec(memory_space=pl.ANY)],
        out_specs=pl.BlockSpec(memory_space=pl.ANY),
        scratch_shapes=[pltpu.SemaphoreType.DMA(())],
    )(x_sq)


_USE_ZERO_COPY = True  # flipped once (per process) if the no-op kernel cannot lower


def squeeze_pallas(x):
    """Exactly reproduces torch.Tensor.squeeze(): removes every size-1 dim."""
    global _USE_ZERO_COPY

    out_shape = tuple(d for d in x.shape if d != 1)
    # Dropping size-1 dims never requires data movement: metadata-only reshape.
    x_sq = jnp.reshape(x, out_shape)

    # 0-d result (all dims were 1) or empty tensor: nothing for a kernel to do,
    # and a rank-0 ref would not add value -> pure metadata path.
    if x_sq.size == 0 or x_sq.ndim == 0:
        return x_sq

    if _USE_ZERO_COPY:
        try:
            return _zero_copy_squeeze(x_sq)
        except Exception:  # lowering fallback only; result stays correct either way
            _USE_ZERO_COPY = False
    return _dma_copy_squeeze(x_sq)


if __name__ == "__main__":
    key = jax.random.PRNGKey(0)
    k1, k2, k3 = jax.random.split(key, 3)

    # 1) Small NCHW-style input with a size-1 channel dim.
    x = jax.random.normal(k1, (2, 1, 16, 16), dtype=jnp.float32)
    out = squeeze_pallas(x)
    jax.block_until_ready(out)
    ref = jnp.squeeze(x)
    assert out.shape == ref.shape == (2, 16, 16), out.shape
    assert out.dtype == x.dtype
    assert jnp.array_equal(out, ref)

    # 2) bf16 input whose element count is NOT a multiple of 128
    #    (exercises the narrow-dtype / odd-size behaviour flagged in review).
    x_bf16 = jax.random.normal(k2, (2, 1, 7, 9), dtype=jnp.bfloat16)
    out_bf16 = squeeze_pallas(x_bf16)
    jax.block_until_ready(out_bf16)
    ref_bf16 = jnp.squeeze(x_bf16)
    assert out_bf16.shape == ref_bf16.shape == (2, 7, 9), out_bf16.shape
    assert out_bf16.dtype == jnp.bfloat16
    assert jnp.array_equal(out_bf16, ref_bf16)

    # 3) Moderately sized multi-dim tensor (size/shape is irrelevant for the
    #    zero-copy path, but validates the wrapper on a bigger array).
    x_mid = jax.random.normal(k3, (1, 8, 64, 128), dtype=jnp.float32)
    out_mid = squeeze_pallas(x_mid)
    jax.block_until_ready(out_mid)
    ref_mid = jnp.squeeze(x_mid)
    assert out_mid.shape == ref_mid.shape == (8, 64, 128), out_mid.shape
    assert jnp.array_equal(out_mid, ref_mid)

    # 4) All-size-1 input: squeeze() yields a 0-d array (metadata-only path).
    x_scalar = jnp.full((1, 1, 1), 2.5, dtype=jnp.float32)
    out_scalar = squeeze_pallas(x_scalar)
    jax.block_until_ready(out_scalar)
    assert out_scalar.shape == ()
    assert jnp.array_equal(out_scalar, jnp.squeeze(x_scalar))

    print("KERNEL_OK")
</pallas_src>

<mosaic_0001>
module attributes {stable_mosaic.version = 11 : i64} {
  func.func @_noop_alias_kernel(%arg0: memref<2x16x16xf32, #tpu.memory_space<any>>, %arg1: memref<2x16x16xf32, #tpu.memory_space<any>>) attributes {dimension_semantics = [], scalar_prefetch = 0 : i64, scratch_operands = 0 : i64, tpu.core_type = #tpu.core_type<tc>} {
    return
  }
}

module attributes {stable_mosaic.version = 11 : i64} {
  func.func @_dma_copy_kernel(%arg0: memref<2x16x16xf32, #tpu.memory_space<any>>, %arg1: memref<2x16x16xf32, #tpu.memory_space<any>>, %arg2: memref<!tpu.dma_semaphore, #tpu.memory_space<semaphore_mem>>) attributes {dimension_semantics = [], scalar_prefetch = 0 : i64, scratch_operands = 1 : i64, tpu.core_type = #tpu.core_type<tc>} {
    tpu.enqueue_dma source(%arg0 : memref<2x16x16xf32, #tpu.memory_space<any>>) target(%arg1 : memref<2x16x16xf32, #tpu.memory_space<any>>) target_semaphore(%arg2 : memref<!tpu.dma_semaphore, #tpu.memory_space<semaphore_mem>>)
    tpu.wait_dma2 semaphore(%arg2 : memref<!tpu.dma_semaphore, #tpu.memory_space<semaphore_mem>>) src(%arg0 : memref<2x16x16xf32, #tpu.memory_space<any>>) dst(%arg1 : memref<2x16x16xf32, #tpu.memory_space<any>>)
    return
  }
}

</mosaic_0001>

<llo_original>
// kernel: tpu_custom_call.1
$region0: #{tpu_custom_call.1}
  #allocation0 [shape = 'u32[]', space=smem, size = 0x4, offset = 0x4, fixed_abs, tag = 'smem constant byte address 0x4 - core index']
  #allocation1 [shape = 'u32[144,128]{1,0:T(1,128)}', space=vmem, size = 0x12000, scoped, tag = 'internal scratch']
  %s0 = inlined_call_operand.hbm [shape: f32[2,16,16], index: 0, kind: input, shape index: {}, may-alias: {0,1}]
  %s1 = inlined_call_operand.hbm [shape: f32[2,16,16], index: 1, kind: output, shape index: {}, may-alias: {0,1}]
  %s2 = sld [smem:[#allocation0]]
  $region2: #{tpu_custom_call.1} parent=0
    _
  %s4 = ssub.s32 1, %s2
  %s5 = scalar_select 0, %s4, %s2

// kernel: tpu_custom_call.1
$region0: #{tpu_custom_call.1}
  #allocation0 [shape = 'u32[]', space=smem, size = 0x4, offset = 0x4, fixed_abs, tag = 'smem constant byte address 0x4 - core index']
  #allocation1 [shape = 'u32[144,128]{1,0:T(1,128)}', space=vmem, size = 0x12000, scoped, tag = 'internal scratch']
  #allocation2 [shape = 's32[1]{0}', space=sflag, size = 0x4, scoped, tag = 'scratch operand']
  #allocation3 [shape = 's32[]', space=sflag, size = 0x4, offset = 0, fixed_abs, tag = 'sflag constant byte address 0x0 - dummy sync flag']
  #allocation4 [shape = 'u32[0]{0}', space=smem, size = 0, offset = 0, fixed_abs, tag = 'smem constant byte address 0x0 - null']
  %s0 = inlined_call_operand.hbm [shape: f32[2,16,16], index: 0, kind: input, shape index: {}]
  %s1 = inlined_call_operand.hbm [shape: f32[2,16,16], index: 1, kind: output, shape index: {}]
  %s2 = sld [smem:[#allocation0]]
  $region2: #{tpu_custom_call.1} parent=0
    _
  %s4 = ssub.s32 1, %s2
  %s5 = scalar_select 0, %s4, %s2
  %s7 = sshll.u32 1, 14
  %s8 = sxor.u32 4294967295, %s7
  %s11 = sshll.u32 3, 24
  %s12 = sxor.u32 4294967295, %s11
  %s13 = sand.u32 0, %s12
  %s15 = sor.u32 %s13, 0
  %18 = dma.general %s0, 512, %s1, [#allocation2], [#allocation3], [#allocation4], %s15, 0
  %s19 = smul.u32 2, 16
  %s20 = smul.u32 %s19, 1
  %s21 = sshll.u32 %s20, 4
  %22 = dma.done [#allocation2], %s21
  %23 = vsyncmov [#allocation2]
  %s24 = vpop.sfrf %23
  %p25 = scmp.eq.s32.totalorder %s24, 0
  %p26 = pneg %p25
  %28 = shalt.err (%p26)

</llo_original>
